<compile_context>
chip_gen: v6e
topology: v6e:2x2x1
jax: 0.10.0
libtpu: 0.0.40
codegen_flags: <defaults>
</compile_context>

<pallas_src>
import functools

import jax
import jax.numpy as jnp
from jax import lax
from jax.experimental import pallas as pl
from jax.experimental.pallas import tpu as pltpu


def _pm_loss_kernel(dr_ref, pts_ref, out_ref, *, tb, n_pad, nc):
    """One grid step: partial L1 sum over a tile of `tb` batches.

    dr_ref : (tb, 9)        f32 VMEM  -- row-major flattened dR = R_pred - R_gt
    pts_ref: (3, tb, n_pad) f32 VMEM  -- x/y/z point planes, zero padded
    out_ref: (8, 128)       f32 VMEM  -- lane-dense partial-sum tile for this block
    """
    n_sb = tb // 8           # batch sub-tiles of 8 sublanes
    n_chunks = n_pad // nc   # lane chunks

    def batch_body(sb, acc):
        row = pl.multiple_of(sb * 8, 8)
        d = dr_ref[pl.ds(row, 8), :]                       # (8, 9)
        d00, d01, d02 = d[:, 0:1], d[:, 1:2], d[:, 2:3]     # (8, 1) each
        d10, d11, d12 = d[:, 3:4], d[:, 4:5], d[:, 5:6]
        d20, d21, d22 = d[:, 6:7], d[:, 7:8], d[:, 8:9]

        def chunk_body(c, acc):
            col = pl.multiple_of(c * nc, nc)
            x = pts_ref[0, pl.ds(row, 8), pl.ds(col, nc)]   # (8, nc)
            y = pts_ref[1, pl.ds(row, 8), pl.ds(col, nc)]
            z = pts_ref[2, pl.ds(row, 8), pl.ds(col, nc)]
            # rows of (points @ dR^T) == est - tgt, summed with abs
            s = jnp.abs(x * d00 + y * d01 + z * d02)
            s = s + jnp.abs(x * d10 + y * d11 + z * d12)
            s = s + jnp.abs(x * d20 + y * d21 + z * d22)
            return acc + s

        return lax.fori_loop(0, n_chunks, chunk_body, acc, unroll=True)

    acc = lax.fori_loop(0, n_sb, batch_body, jnp.zeros((8, nc), jnp.float32))

    # Fold (8, nc) down to one lane-dense (8, 128) tile (pure VALU adds,
    # unmasked full-tile store; each grid step owns its own output tile).
    folded = acc[:, 0:128]
    for j in range(1, nc // 128):
        folded = folded + acc[:, j * 128:(j + 1) * 128]
    out_ref[...] = folded


@functools.partial(jax.jit, static_argnames=("loss_weight", "norm_by_extent"))
def pm_loss(pred_rots, gt_rots, points, extents=None,
            loss_weight=1.0, norm_by_extent=False):
    """
    pred_rots: [B, 3, 3] float32
    gt_rots:   [B, 3, 3] float32
    points:    [B, n, 3] float32
    extents:   [B, 3] float32 or None
    """
    B, n, _ = points.shape
    points = points.astype(jnp.float32)
    dr = pred_rots.astype(jnp.float32) - gt_rots.astype(jnp.float32)   # (B, 3, 3)

    if norm_by_extent:
        assert extents is not None
        # w * (p @ dR^T) == (w * p) @ dR^T exactly -> fold weights into points.
        weights = 1.0 / jnp.max(extents.astype(jnp.float32), axis=1, keepdims=True)
        points = points * weights[:, :, None]

    # ---- tiling --------------------------------------------------------
    n_pad = max(128, ((n + 127) // 128) * 128)
    bytes_per_batch = 3 * n_pad * 4                   # true bytes/batch in new layout
    target_block_bytes = 8 * 1024 * 1024              # ~8 MiB point block per step

    tb_max = max(8, (target_block_bytes // bytes_per_batch) // 8 * 8)
    b_ceil8 = ((B + 7) // 8) * 8
    tb_max = min(tb_max, b_ceil8)
    if b_ceil8 >= 16:                                  # keep >=2 blocks (v7x: 2 TCs)
        tb_max = min(tb_max, max(8, (b_ceil8 // 2) // 8 * 8))
    num_blocks = -(-b_ceil8 // tb_max)
    tb = -(-(-(-b_ceil8 // num_blocks)) // 8) * 8      # balanced, multiple of 8
    b_pad = num_blocks * tb

    # Lane-chunk width inside the kernel: big enough to stream, small enough
    # that live operands + accumulator stay well under 64 vregs.
    if n_pad % 512 == 0:
        nc = 512
    elif n_pad % 256 == 0:
        nc = 256
    else:
        nc = 128

    # ---- host-side relayout (zero padding contributes exactly 0) --------
    pts_t = jnp.transpose(points, (2, 0, 1))                        # (3, B, n)
    pts_t = jnp.pad(pts_t, ((0, 0), (0, b_pad - B), (0, n_pad - n)))  # (3, b_pad, n_pad)
    dr = jnp.pad(dr, ((0, b_pad - B), (0, 0), (0, 0)))              # zero dR for pad batches
    dr9 = dr.reshape(num_blocks, tb, 9)

    pts_block_bytes = 3 * tb * n_pad * 4
    dr_block_bytes = tb * 128 * 4        # minor dim 9 lane-pads to 128 in VMEM
    out_block_bytes = 8 * 128 * 4
    # Double-buffered footprint + headroom; >= 24 MiB (v5e scoped default is 16 MiB).
    # For extreme point counts shrink target_block_bytes to stay under v7x's 64 MiB.
    vmem_limit = int(max(24 << 20,
                         2 * (pts_block_bytes + dr_block_bytes + out_block_bytes) + (4 << 20)))

    partials = pl.pallas_call(
        functools.partial(_pm_loss_kernel, tb=tb, n_pad=n_pad, nc=nc),
        out_shape=jax.ShapeDtypeStruct((num_blocks, 8, 128), jnp.float32),
        grid_spec=pltpu.PrefetchScalarGridSpec(
            num_scalar_prefetch=0,
            grid=(num_blocks,),
            in_specs=[
                # per-step dR tile (VMEM), squeezed leading block index
                pl.BlockSpec((None, tb, 9), lambda g: (g, 0, 0)),
                # x/y/z planes: lane-dense (tb, n_pad) slabs, full (8,128) tiles
                pl.BlockSpec((3, tb, n_pad), lambda g: (0, g, 0)),
            ],
            # each grid step writes its own lane-dense (8, 128) tile
            out_specs=pl.BlockSpec((None, 8, 128), lambda g: (g, 0, 0)),
        ),
        compiler_params=pltpu.CompilerParams(
            dimension_semantics=("parallel",),
            vmem_limit_bytes=vmem_limit),
    )(dr9, pts_t)

    # nn.L1Loss(reduction='mean') divides by the true element count B*n*3.
    loss = jnp.sum(partials) / jnp.float32(B * n * 3)
    return 3.0 * loss * jnp.float32(loss_weight)


def _reference_pm_loss(pred_rots, gt_rots, points, loss_weight=1.0):
    est = jnp.einsum("bij,bnj->bni", pred_rots, points)
    tgt = jnp.einsum("bij,bnj->bni", gt_rots, points)
    return 3.0 * jnp.mean(jnp.abs(est - tgt)) * loss_weight


if __name__ == "__main__":
    key = jax.random.PRNGKey(0)
    k1, k2, k3 = jax.random.split(key, 3)

    B, n = 2, 8
    # Deterministic "rotations": orthonormalize random matrices via QR.
    pred_rots = jnp.linalg.qr(jax.random.normal(k1, (B, 3, 3), jnp.float32))[0]
    gt_rots = jnp.linalg.qr(jax.random.normal(k2, (B, 3, 3), jnp.float32))[0]
    points = jax.random.normal(k3, (B, n, 3), jnp.float32)

    out = pm_loss(pred_rots, gt_rots, points, loss_weight=1.0)
    out = jax.block_until_ready(out)

    ref = _reference_pm_loss(pred_rots, gt_rots, points, loss_weight=1.0)
    assert jnp.allclose(out, ref, rtol=1e-5, atol=1e-5), (out, ref)

    print("KERNEL_OK")
</pallas_src>

<mosaic_0001>
module attributes {stable_mosaic.version = 11 : i64} {
  func.func @_pm_loss_kernel(%arg0: i32, %arg1: memref<1x8x9xf32, #tpu.memory_space<vmem>>, %arg2: memref<3x8x128xf32, #tpu.memory_space<vmem>>, %arg3: memref<1x8x128xf32, #tpu.memory_space<vmem>>) attributes {dimension_semantics = [#tpu.dimension_semantics<parallel>], iteration_bounds = array<i64: 1>, scalar_prefetch = 0 : i64, scratch_operands = 0 : i64, tpu.core_type = #tpu.core_type<tc>, window_params = [{transform_indices = @transform_0, window_bounds = array<i64: 1, 8, 9>}, {transform_indices = @transform_1, window_bounds = array<i64: 3, 8, 128>}, {transform_indices = @transform_2, window_bounds = array<i64: 1, 8, 128>}]} {
    %cst = arith.constant 0.000000e+00 : f32
    %0 = vector.broadcast %cst : f32 to vector<8x128xf32>
    %c0_i32 = arith.constant 0 : i32
    %c8_i32 = arith.constant 8 : i32
    %1 = arith.muli %c0_i32, %c8_i32 : i32
    %2 = tpu.assume_multiple %1, 8 : i32
    %c0 = arith.constant 0 : index
    %3 = arith.index_cast %2 : i32 to index
    %c0_0 = arith.constant 0 : index
    %4 = vector.load %arg1[%c0, %3, %c0_0] : memref<1x8x9xf32, #tpu.memory_space<vmem>>, vector<1x8x9xf32>
    %5 = vector.shape_cast %4 : vector<1x8x9xf32> to vector<8x9xf32>
    %6 = vector.extract_strided_slice %5 {offsets = [0, 0], sizes = [8, 1], strides = [1, 1]} : vector<8x9xf32> to vector<8x1xf32>
    %7 = vector.extract_strided_slice %5 {offsets = [0, 1], sizes = [8, 1], strides = [1, 1]} : vector<8x9xf32> to vector<8x1xf32>
    %8 = vector.extract_strided_slice %5 {offsets = [0, 2], sizes = [8, 1], strides = [1, 1]} : vector<8x9xf32> to vector<8x1xf32>
    %9 = vector.extract_strided_slice %5 {offsets = [0, 3], sizes = [8, 1], strides = [1, 1]} : vector<8x9xf32> to vector<8x1xf32>
    %10 = vector.extract_strided_slice %5 {offsets = [0, 4], sizes = [8, 1], strides = [1, 1]} : vector<8x9xf32> to vector<8x1xf32>
    %11 = vector.extract_strided_slice %5 {offsets = [0, 5], sizes = [8, 1], strides = [1, 1]} : vector<8x9xf32> to vector<8x1xf32>
    %12 = vector.extract_strided_slice %5 {offsets = [0, 6], sizes = [8, 1], strides = [1, 1]} : vector<8x9xf32> to vector<8x1xf32>
    %13 = vector.extract_strided_slice %5 {offsets = [0, 7], sizes = [8, 1], strides = [1, 1]} : vector<8x9xf32> to vector<8x1xf32>
    %14 = vector.extract_strided_slice %5 {offsets = [0, 8], sizes = [8, 1], strides = [1, 1]} : vector<8x9xf32> to vector<8x1xf32>
    %c0_i32_1 = arith.constant 0 : i32
    %c128_i32 = arith.constant 128 : i32
    %15 = arith.muli %c0_i32_1, %c128_i32 : i32
    %16 = tpu.assume_multiple %15, 128 : i32
    %c0_2 = arith.constant 0 : index
    %17 = arith.index_cast %2 : i32 to index
    %18 = arith.index_cast %16 : i32 to index
    %19 = vector.load %arg2[%c0_2, %17, %18] : memref<3x8x128xf32, #tpu.memory_space<vmem>>, vector<1x8x128xf32>
    %20 = vector.shape_cast %19 : vector<1x8x128xf32> to vector<8x128xf32>
    %c1 = arith.constant 1 : index
    %21 = arith.index_cast %2 : i32 to index
    %22 = arith.index_cast %16 : i32 to index
    %23 = vector.load %arg2[%c1, %21, %22] : memref<3x8x128xf32, #tpu.memory_space<vmem>>, vector<1x8x128xf32>
    %24 = vector.shape_cast %23 : vector<1x8x128xf32> to vector<8x128xf32>
    %c2 = arith.constant 2 : index
    %25 = arith.index_cast %2 : i32 to index
    %26 = arith.index_cast %16 : i32 to index
    %27 = vector.load %arg2[%c2, %25, %26] : memref<3x8x128xf32, #tpu.memory_space<vmem>>, vector<1x8x128xf32>
    %28 = vector.shape_cast %27 : vector<1x8x128xf32> to vector<8x128xf32>
    %29 = vector.broadcast %6 : vector<8x1xf32> to vector<8x128xf32>
    %30 = arith.mulf %20, %29 : vector<8x128xf32>
    %31 = vector.broadcast %7 : vector<8x1xf32> to vector<8x128xf32>
    %32 = arith.mulf %24, %31 : vector<8x128xf32>
    %33 = arith.addf %30, %32 : vector<8x128xf32>
    %34 = vector.broadcast %8 : vector<8x1xf32> to vector<8x128xf32>
    %35 = arith.mulf %28, %34 : vector<8x128xf32>
    %36 = arith.addf %33, %35 : vector<8x128xf32>
    %37 = math.absf %36 : vector<8x128xf32>
    %38 = vector.broadcast %9 : vector<8x1xf32> to vector<8x128xf32>
    %39 = arith.mulf %20, %38 : vector<8x128xf32>
    %40 = vector.broadcast %10 : vector<8x1xf32> to vector<8x128xf32>
    %41 = arith.mulf %24, %40 : vector<8x128xf32>
    %42 = arith.addf %39, %41 : vector<8x128xf32>
    %43 = vector.broadcast %11 : vector<8x1xf32> to vector<8x128xf32>
    %44 = arith.mulf %28, %43 : vector<8x128xf32>
    %45 = arith.addf %42, %44 : vector<8x128xf32>
    %46 = math.absf %45 : vector<8x128xf32>
    %47 = arith.addf %37, %46 : vector<8x128xf32>
    %48 = vector.broadcast %12 : vector<8x1xf32> to vector<8x128xf32>
    %49 = arith.mulf %20, %48 : vector<8x128xf32>
    %50 = vector.broadcast %13 : vector<8x1xf32> to vector<8x128xf32>
    %51 = arith.mulf %24, %50 : vector<8x128xf32>
    %52 = arith.addf %49, %51 : vector<8x128xf32>
    %53 = vector.broadcast %14 : vector<8x1xf32> to vector<8x128xf32>
    %54 = arith.mulf %28, %53 : vector<8x128xf32>
    %55 = arith.addf %52, %54 : vector<8x128xf32>
    %56 = math.absf %55 : vector<8x128xf32>
    %57 = arith.addf %47, %56 : vector<8x128xf32>
    %58 = arith.addf %0, %57 : vector<8x128xf32>
    %c1_i32 = arith.constant 1 : i32
    %c1_i32_3 = arith.constant 1 : i32
    %c0_4 = arith.constant 0 : index
    %c0_5 = arith.constant 0 : index
    %c0_6 = arith.constant 0 : index
    %59 = vector.load %arg3[%c0_4, %c0_5, %c0_6] : memref<1x8x128xf32, #tpu.memory_space<vmem>>, vector<1x8x128xf32>
    %60 = vector.shape_cast %59 : vector<1x8x128xf32> to vector<8x128xf32>
    %61 = vector.shape_cast %58 : vector<8x128xf32> to vector<1x8x128xf32>
    tpu.vector_store %arg3[%c0_4, %c0_5, %c0_6], %61 {strides = array<i32>} : memref<1x8x128xf32, #tpu.memory_space<vmem>>, vector<1x8x128xf32>,
    return
  }
  func.func @transform_0(%arg0: i32) -> (i32, i32, i32) {
    %c0_i32 = arith.constant 0 : i32
    %c0_i32_0 = arith.constant 0 : i32
    %c0_i32_1 = arith.constant 0 : i32
    return %arg0, %c0_i32, %c0_i32_0 : i32, i32, i32
  }
  func.func @transform_1(%arg0: i32) -> (i32, i32, i32) {
    %c0_i32 = arith.constant 0 : i32
    %c0_i32_0 = arith.constant 0 : i32
    %c0_i32_1 = arith.constant 0 : i32
    return %c0_i32, %arg0, %c0_i32_0 : i32, i32, i32
  }
  func.func @transform_2(%arg0: i32) -> (i32, i32, i32) {
    %c0_i32 = arith.constant 0 : i32
    %c0_i32_0 = arith.constant 0 : i32
    %c0_i32_1 = arith.constant 0 : i32
    return %arg0, %c0_i32, %c0_i32_0 : i32, i32, i32
  }
}

</mosaic_0001>

<llo_original>
// kernel: sub.1
$region0: #{sub.1}
  #allocation4 [shape = 's32[1]{0}', space=sflag, size = 0x4, scoped, tag = 'scoped memory for sub.1']
  %s0 = inlined_call_operand.hbm [shape: f32[2,3,3], index: 0, kind: input, shape index: {}]
  %s1 = inlined_call_operand.hbm [shape: f32[2,3,3], index: 1, kind: input, shape index: {}]
  %s2 = inlined_call_operand.vmem [shape: f32[2,3,3], index: 2, kind: output, shape index: {}]
  $region1: #{sub.1} parent=0
    #allocation0 [shape = 'u8[3072]{0}', space=vmem, size = 0xc00, scoped, tag = 'operand span for operand 0']
    #allocation1 [shape = 's32[1]{0}', space=sflag, size = 0x4, scoped, tag = 'scoped memory for sub.1']
    #allocation2 [shape = 'u8[3072]{0}', space=vmem, size = 0xc00, scoped, tag = 'operand span for operand 1']
    #allocation3 [shape = 's32[1]{0}', space=sflag, size = 0x4, scoped, tag = 'scoped memory for sub.1']
    %3 = vsyncpa [#allocation1], 0
    %4 = vsyncpa [#allocation3], 0
    %s6 = ssub.s32 96, 96
    %7 = vsyncadd [#allocation1], %s6
    %s8 = sshll.u32 [#allocation0], 4
    %s9 = int_to_ptr.vmem [resolvable:$true] %s8
    %14 = dma.hbm_to_vmem [thread:$0]  %s0, 96, %s9, [#allocation1], 32, 32, 2
    %s16 = ssub.s32 96, 96
    %17 = vsyncadd [#allocation3], %s16
    %s18 = sshll.u32 [#allocation2], 4
    %s19 = int_to_ptr.vmem [resolvable:$true] %s18
    %24 = dma.hbm_to_vmem [thread:$0]  %s1, 96, %s19, [#allocation3], 32, 32, 2
    %25 = dma.done [#allocation1], 96
    %26 = dma.done [#allocation3], 96
    %v27 = vld [vmem:[#allocation0] sm:$0x3]
    %v28 = vld [vmem:[#allocation2] sm:$0x3]
    %29 = xla_tuple %v27, %v28
    %30 = xla_tuple %29
    %v31 = vsub.f32 %v27, %v28
    %32 = xla_tuple %v31
    %33 = vst [vmem:[%s2] sm:$0x3] %v31
    %s34 = scalar_lea.vmem [#allocation0], 2
    %v35 = vld [vmem:[%s34] sm:$0x3]
    %s36 = scalar_lea.vmem [#allocation2], 2
    %v37 = vld [vmem:[%s36] sm:$0x3]
    %38 = xla_tuple %v35, %v37
    %39 = xla_tuple %38
    %v40 = vsub.f32 %v35, %v37
    %41 = xla_tuple %v40
    %s42 = scalar_lea.vmem %s2, 2
    %43 = vst [vmem:[%s42] sm:$0x3] %v40
    %s44 = scalar_lea.vmem [#allocation0], 4
    %v45 = vld [vmem:[%s44] sm:$0x3]
    %s46 = scalar_lea.vmem [#allocation2], 4
    %v47 = vld [vmem:[%s46] sm:$0x3]
    %48 = xla_tuple %v45, %v47
    %49 = xla_tuple %48
    %v50 = vsub.f32 %v45, %v47
    %51 = xla_tuple %v50
    %s52 = scalar_lea.vmem %s2, 4
    %53 = vst [vmem:[%s52] sm:$0x3] %v50
    %54 = vsyncpa [#allocation1], 1
    %55 = vsyncpa [#allocation3], 1

// kernel: pm_loss.1
$region0: #{pm_loss.1}
  #allocation0 [shape = 'u32[]', space=smem, size = 0x4, offset = 0x4, fixed_abs, tag = 'smem constant byte address 0x4 - core index']
  #allocation1 [shape = 'u32[144,128]{1,0:T(1,128)}', space=vmem, size = 0x12000, scoped, tag = 'internal scratch']
  %s0 = inlined_call_operand.vmem [shape: f32[1,8,9], index: 0, kind: input, shape index: {}]
  %s1 = inlined_call_operand.vmem [shape: f32[3,8,128], index: 1, kind: input, shape index: {}]
  %s2 = inlined_call_operand.vmem [shape: f32[1,8,128], index: 2, kind: output, shape index: {}]
  %s3 = sld [smem:[#allocation0]]
  $region18: #{pm_loss.1} parent=0
    _
  %s5 = ssub.s32 1, %s3
  %s6 = scalar_select 0, %s5, %s3
  // Predicated region
  $region2: #{pm_loss.1} parent=0 // pred_check
    _
  $region3: #{pm_loss.1} parent=0 // pred_check_branch
    %8 = sbr.rel (0) target = $region5
  $region4: #{pm_loss.1} parent=0 // pred_region
    _
  $region5: #{pm_loss.1} parent=0 // pred_fallthru
    _
  // Predicated region
  $region6: #{pm_loss.1} parent=0 // pred_check
    _
  $region7: #{pm_loss.1} parent=0 // pred_check_branch
    %10 = sbr.rel (0) target = $region9
  $region8: #{pm_loss.1} parent=0 // pred_region
    _
  $region9: #{pm_loss.1} parent=0 // pred_fallthru
    _
  %v11 = vld [vmem:[%s0] sm:$0xff]
  %s12 = sadd.s32 0, 0
  %s13 = scalar_lea.vmem %s1, %s12
  %v14 = vld [vmem:[%s13] sm:$0xff]
  %s15 = sadd.s32 %s12, 8
  %s16 = scalar_lea.vmem %s1, %s15
  %v17 = vld [vmem:[%s16] sm:$0xff]
  %s18 = sadd.s32 %s12, 16
  %s19 = scalar_lea.vmem %s1, %s18
  %v20 = vld [vmem:[%s19] sm:$0xff]
  %22 = vset.pattern.permute.xlu0 0
  %23 = vperm.xlu0 %22, %v11
  %v24 = vpop.permute.xlu0 %23
  %v26 = vmul.f32 %v14, %v24
  %27 = vset.pattern.permute.xlu0 1
  %28 = vperm.xlu0 %27, %v11
  %v29 = vpop.permute.xlu0 %28
  %v31 = vmul.f32 %v17, %v29
  %v32 = vadd.f32 %v26, %v31
  %33 = vset.pattern.permute.xlu0 2
  %34 = vperm.xlu0 %33, %v11
  %v35 = vpop.permute.xlu0 %34
  %v37 = vmul.f32 %v20, %v35
  %v38 = vadd.f32 %v32, %v37
  %v39 = vand.u32 2147483647, %v38
  %40 = vset.pattern.permute.xlu0 3
  %41 = vperm.xlu0 %40, %v11
  %v42 = vpop.permute.xlu0 %41
  %v44 = vmul.f32 %v14, %v42
  %45 = vset.pattern.permute.xlu0 4
  %46 = vperm.xlu0 %45, %v11
  %v47 = vpop.permute.xlu0 %46
  %v49 = vmul.f32 %v17, %v47
  %v50 = vadd.f32 %v44, %v49
  %51 = vset.pattern.permute.xlu0 5
  %52 = vperm.xlu0 %51, %v11
  %v53 = vpop.permute.xlu0 %52
  %v55 = vmul.f32 %v20, %v53
  %v56 = vadd.f32 %v50, %v55
  %v57 = vand.u32 2147483647, %v56
  %v58 = vadd.f32 %v39, %v57
  %59 = vset.pattern.permute.xlu0 6
  %60 = vperm.xlu0 %59, %v11
  %v61 = vpop.permute.xlu0 %60
  %v63 = vmul.f32 %v14, %v61
  %64 = vset.pattern.permute.xlu0 7
  %65 = vperm.xlu0 %64, %v11
  %v66 = vpop.permute.xlu0 %65
  %v68 = vmul.f32 %v17, %v66
  %v69 = vadd.f32 %v63, %v68
  %70 = vset.pattern.permute.xlu0 8
  %71 = vperm.xlu0 %70, %v11
  %v72 = vpop.permute.xlu0 %71
  %v74 = vmul.f32 %v20, %v72
  %v75 = vadd.f32 %v69, %v74
  %v76 = vand.u32 2147483647, %v75
  %v77 = vadd.f32 %v58, %v76
  %v78 = vadd.f32 %v77, 0.0
  %79 = vst [vmem:[%s2] sm:$0xff] %v78
  // Predicated region
  $region10: #{pm_loss.1} parent=0 // pred_check
    _
  $region11: #{pm_loss.1} parent=0 // pred_check_branch
    %81 = sbr.rel (0) target = $region13
  $region12: #{pm_loss.1} parent=0 // pred_region
    _
  $region13: #{pm_loss.1} parent=0 // pred_fallthru
    _
  // Predicated region
  $region14: #{pm_loss.1} parent=0 // pred_check
    _
  $region15: #{pm_loss.1} parent=0 // pred_check_branch
    %83 = sbr.rel (0) target = $region17
  $region16: #{pm_loss.1} parent=0 // pred_region
    _
  $region17: #{pm_loss.1} parent=0 // pred_fallthru
    _

</llo_original>
